<compile_context>
chip_gen: v5e
topology: v5e:2x2
jax: 0.10.0
libtpu: 0.0.40
codegen_flags: <defaults>
</compile_context>

<pallas_src>
import functools

import jax
import jax.numpy as jnp
from jax import lax
from jax.experimental import pallas as pl
from jax.experimental.pallas import tpu as pltpu


def _round_up(a, b):
    return (a + b - 1) // b * b


def _lrn_kernel(a_ref, x_ref, o_ref, *, beta):
    # a_ref: (Cp, Cp) banded window matrix, alpha/local_size folded in.
    # x_ref / o_ref: (1, Cp, T) block (one batch element, one spatial tile).
    x = x_ref[0].astype(jnp.float32)                  # (Cp, T)
    sq = x * x

    # Across-channel window sum on the MXU (otherwise idle in this kernel).
    acc = jnp.dot(a_ref[...], sq, preferred_element_type=jnp.float32)
    div = acc + 1.0                                   # div >= 1 for alpha >= 0

    if beta == 0.75:
        # div^-0.75 = rsqrt(div) * sqrt(rsqrt(div))  -- 2 EUP ops, no divide.
        r = lax.rsqrt(div)
        inv = r * jnp.sqrt(r)
    else:
        # General beta: div^-beta via exp/log (EUP path, div > 0).
        inv = jnp.exp(-beta * jnp.log(div))

    o_ref[0] = (x * inv).astype(o_ref.dtype)


def lrn(x, local_size=1, alpha=1.0, beta=0.75, across_channels=True):
    """LRN forward. x: (N, C, H, W). Returns same shape/dtype."""
    assert across_channels, "only ACROSS_CHANNELS=True path implemented"
    N, C, H, W = x.shape
    pad = int((local_size - 1.0) / 2)
    HW = H * W

    LANE = 128
    SUBLANE = 8
    Cp = _round_up(C, SUBLANE)

    # Spatial tile: lane-dense (multiple of 128), capped at 2048 lanes and at
    # ~1 MiB per (Cp, T) f32 buffer so double-buffered in+out plus body
    # temporaries stay well under the 16 MiB scoped-VMEM default on v5e.
    max_t = max(LANE, ((1 << 20) // (4 * Cp)) // LANE * LANE)
    T = min(_round_up(HW, LANE), max_t, 2048)
    HWp = _round_up(HW, T)
    n_spatial = HWp // T

    x2 = x.reshape(N, C, HW)
    if Cp != C or HWp != HW:
        # Zero padding == the AvgPool zero padding; real-channel results are
        # unaffected and padded rows/lanes are sliced off below.
        x2 = jnp.pad(x2, ((0, 0), (0, Cp - C), (0, HWp - HW)))

    # Static banded matrix: A[c, j] = alpha/local_size iff j in the channel
    # window [c - pad, c - pad + local_size - 1] (clipped to valid indices).
    c_idx = jnp.arange(Cp)[:, None]
    j_idx = jnp.arange(Cp)[None, :]
    band = (j_idx >= c_idx - pad) & (j_idx <= c_idx - pad + (local_size - 1))
    a_mat = band.astype(jnp.float32) * (float(alpha) / float(local_size))

    kernel = functools.partial(_lrn_kernel, beta=float(beta))

    out = pl.pallas_call(
        kernel,
        out_shape=jax.ShapeDtypeStruct((N, Cp, HWp), x.dtype),
        grid_spec=pltpu.PrefetchScalarGridSpec(
            num_scalar_prefetch=0,
            grid=(N, n_spatial),
            in_specs=[
                pl.BlockSpec((Cp, Cp), lambda n, s: (0, 0)),      # resident A
                pl.BlockSpec((1, Cp, T), lambda n, s: (n, 0, s)),  # x tile
            ],
            out_specs=pl.BlockSpec((1, Cp, T), lambda n, s: (n, 0, s)),
        ),
        compiler_params=pltpu.CompilerParams(
            dimension_semantics=("parallel", "parallel")),
    )(a_mat, x2)

    return out[:, :C, :HW].reshape(N, C, H, W)


def _lrn_ref(x, local_size=1, alpha=1.0, beta=0.75):
    """Pure-JAX reference matching the PyTorch module."""
    N, C, H, W = x.shape
    pad = int((local_size - 1.0) / 2)
    sq = x * x
    sq_p = jnp.pad(sq, ((0, 0), (pad, local_size - 1 - pad), (0, 0), (0, 0)))
    acc = jnp.zeros_like(x)
    for k in range(local_size):
        acc = acc + sq_p[:, k:k + C]
    div = (acc * (alpha / local_size) + 1.0) ** beta
    return x / div


if __name__ == "__main__":
    key = jax.random.PRNGKey(0)
    k0, k1 = jax.random.split(key)

    # Default module config (local_size=1, alpha=1.0, beta=0.75).
    x = jax.random.normal(k0, (2, 4, 16, 16), dtype=jnp.float32)
    out = jax.block_until_ready(
        lrn(x, local_size=1, alpha=1.0, beta=0.75, across_channels=True))
    ref = _lrn_ref(x, local_size=1, alpha=1.0, beta=0.75)
    assert out.shape == x.shape and out.dtype == x.dtype
    assert jnp.allclose(out, ref, atol=1e-5, rtol=1e-4)

    # Exercise the banded-window path: local_size=5, C not a multiple of 8,
    # H*W not a multiple of 128 (forces channel + lane padding).
    x2 = jax.random.normal(k1, (2, 6, 7, 7), dtype=jnp.float32)
    out2 = jax.block_until_ready(lrn(x2, local_size=5, alpha=2.0, beta=0.75))
    ref2 = _lrn_ref(x2, local_size=5, alpha=2.0, beta=0.75)
    assert jnp.allclose(out2, ref2, atol=1e-5, rtol=1e-4)

    # Non-default beta exercises the general exp/log pow path.
    out3 = jax.block_until_ready(lrn(x2, local_size=3, alpha=0.5, beta=0.6))
    ref3 = _lrn_ref(x2, local_size=3, alpha=0.5, beta=0.6)
    assert jnp.allclose(out3, ref3, atol=1e-5, rtol=1e-4)

    print("KERNEL_OK")
</pallas_src>

<mosaic_0001>
module attributes {stable_mosaic.version = 11 : i64} {
  func.func @_lrn_kernel(%arg0: i32, %arg1: i32, %arg2: memref<8x8xf32, #tpu.memory_space<vmem>>, %arg3: memref<1x8x256xf32, #tpu.memory_space<vmem>>, %arg4: memref<1x8x256xf32, #tpu.memory_space<vmem>>) attributes {dimension_semantics = [#tpu.dimension_semantics<parallel>, #tpu.dimension_semantics<parallel>], iteration_bounds = array<i64: 2, 1>, scalar_prefetch = 0 : i64, scratch_operands = 0 : i64, tpu.core_type = #tpu.core_type<tc>, window_params = [{pipeline_mode = #tpu.pipeline_mode<synchronous>, transform_indices = @transform_0, window_bounds = array<i64: 8, 8>}, {transform_indices = @transform_1, window_bounds = array<i64: 1, 8, 256>}, {transform_indices = @transform_2, window_bounds = array<i64: 1, 8, 256>}]} {
    %c0 = arith.constant 0 : index
    %c0_0 = arith.constant 0 : index
    %c0_1 = arith.constant 0 : index
    %0 = vector.load %arg3[%c0, %c0_0, %c0_1] : memref<1x8x256xf32, #tpu.memory_space<vmem>>, vector<1x8x256xf32>
    %1 = vector.shape_cast %0 : vector<1x8x256xf32> to vector<8x256xf32>
    %2 = arith.mulf %1, %1 : vector<8x256xf32>
    %c0_2 = arith.constant 0 : index
    %c0_3 = arith.constant 0 : index
    %3 = vector.load %arg2[%c0_2, %c0_3] : memref<8x8xf32, #tpu.memory_space<vmem>>, vector<8x8xf32>
    %cst = arith.constant dense<0.000000e+00> : vector<8x256xf32>
    %4 = tpu.matmul %3, %2, %cst {dimension_numbers = #tpu.dot_dimension_numbers<[1], [0], [0], [1], [0, 0, 1, 1], [], []>} : vector<8x8xf32>, vector<8x256xf32>, vector<8x256xf32> -> vector<8x256xf32>
    %cst_4 = arith.constant 1.000000e+00 : f32
    %5 = vector.broadcast %cst_4 : f32 to vector<8x256xf32>
    %6 = arith.addf %4, %5 : vector<8x256xf32>
    %7 = math.rsqrt %6 : vector<8x256xf32>
    %8 = math.sqrt %7 : vector<8x256xf32>
    %9 = arith.mulf %7, %8 : vector<8x256xf32>
    %10 = arith.mulf %1, %9 : vector<8x256xf32>
    %c0_5 = arith.constant 0 : index
    %c0_6 = arith.constant 0 : index
    %c0_7 = arith.constant 0 : index
    %11 = vector.load %arg4[%c0_5, %c0_6, %c0_7] : memref<1x8x256xf32, #tpu.memory_space<vmem>>, vector<1x8x256xf32>
    %12 = vector.shape_cast %11 : vector<1x8x256xf32> to vector<8x256xf32>
    %13 = vector.shape_cast %10 : vector<8x256xf32> to vector<1x8x256xf32>
    tpu.vector_store %arg4[%c0_5, %c0_6, %c0_7], %13 {strides = array<i32>} : memref<1x8x256xf32, #tpu.memory_space<vmem>>, vector<1x8x256xf32>,
    return
  }
  func.func @transform_0(%arg0: i32, %arg1: i32) -> (i32, i32) {
    %c0_i32 = arith.constant 0 : i32
    %c0_i32_0 = arith.constant 0 : i32
    %c0_i32_1 = arith.constant 0 : i32
    return %c0_i32, %c0_i32_0 : i32, i32
  }
  func.func @transform_1(%arg0: i32, %arg1: i32) -> (i32, i32, i32) {
    %c0_i32 = arith.constant 0 : i32
    %c0_i32_0 = arith.constant 0 : i32
    return %arg0, %c0_i32, %arg1 : i32, i32, i32
  }
  func.func @transform_2(%arg0: i32, %arg1: i32) -> (i32, i32, i32) {
    %c0_i32 = arith.constant 0 : i32
    %c0_i32_0 = arith.constant 0 : i32
    return %arg0, %c0_i32, %arg1 : i32, i32, i32
  }
}

</mosaic_0001>

<llo_original>
// kernel: tpu_custom_call.1
$region0: #{tpu_custom_call.1}
  #allocation0 [shape = 'u32[]', space=smem, size = 0x4, offset = 0x4, fixed_abs, tag = 'smem constant byte address 0x4 - core index']
  #allocation1 [shape = 'u32[72,128]{1,0:T(1,128)}', space=vmem, size = 0x9000, scoped, tag = 'internal scratch']
  %s0 = inlined_call_operand.hbm [shape: f32[8,8], index: 0, kind: input, shape index: {}]
  %s1 = inlined_call_operand.hbm [shape: f32[2,8,256], index: 1, kind: input, shape index: {}]
  %s2 = inlined_call_operand.hbm [shape: f32[2,8,256], index: 2, kind: output, shape index: {}]
  %s3 = sld [smem:[#allocation0]]
  $region49: #{tpu_custom_call.1} parent=0
    _
  %s5 = ssub.s32 1, %s3
  %s6 = scalar_select 0, %s5, %s3
  $region1: #{tpu_custom_call.1} parent=0
    #allocation2 [shape = 'u8[4096]{0}', space=vmem, size = 0x1000, scoped, tag = 'input window, operand 0, single buffered']
    #allocation3 [shape = 's32[2]{0}', space=sflag, size = 0x8, scoped, tag = 'scoped memory for tpu_custom_call.1']
    #allocation4 [shape = 's32[2]{0}', space=sflag, size = 0x8, scoped, tag = 'scoped memory for tpu_custom_call.1']
    #allocation5 [shape = 'u8[16384]{0}', space=vmem, size = 0x4000, scoped, tag = 'input window, operand 1']
    #allocation6 [shape = 's32[2]{0}', space=sflag, size = 0x8, scoped, tag = 'scoped memory for tpu_custom_call.1']
    #allocation7 [shape = 'u8[16384]{0}', space=vmem, size = 0x4000, scoped, tag = 'output window, operand 0']
    %7 = vsyncpa [#allocation3], 0
    %8 = vsyncpa [#allocation6], 0
    %s9 = scalar_lea.sflag [#allocation6], 1
    %10 = vsyncpa %s9, 0
    %11 = vsyncpa [#allocation4], 0
    %s12 = scalar_lea.sflag [#allocation4], 1
    %13 = vsyncpa %s12, 0
    loop: start=0, step=1, limit=4
    $region2: #{tpu_custom_call.1} parent=1 // loop_pre_header
      _
    $region3: #{tpu_custom_call.1} parent=1 // loop_header
      %s15 = sphi 0, %s19
      %p16 = scmp.ge.s32.totalorder %s15, 4
      %s22 = sphi 0, %s34
      %s23 = sphi 0, %s30
      %s24 = sphi 0, %s22
      %s25 = sphi 0, %s23
      %s26 = sphi 0, %s24
      %s27 = sphi 0, %s25
      %s35 = sphi 0, %s35
      %s37 = sphi 0, %s35
      %s38 = sphi 0, %s37
      %s52 = sphi 0, %s38
      %s60 = sphi 0, %s62
      %s63 = sphi 0, %s60
      %s64 = sphi 0, %s63
      %s80 = sphi 0, %s64
      %s88 = sphi 0, %s90
      %s91 = sphi 0, %s88
      %s92 = sphi 0, %s91
      %s108 = sphi 0, %s92
    $region4: #{tpu_custom_call.1} parent=1 // loop_header_branch
      %18 = sbr.rel (%p16) target = $region8
    $region5: #{tpu_custom_call.1} parent=1 // loop_body
      %s20 = ssub.s32 %s15, 1
      %s21 = ssub.s32 %s15, 2
      %s28 = sadd.s32 1, %s23
      %p29 = scmp.ge.s32.totalorder %s28, 1
      %s30 = scalar_select %p29, 0, %s28
      %s31 = sadd.s32 1, %s22
      %s32 = scalar_select %p29, %s31, %s22
      %p33 = scmp.ge.s32.totalorder %s32, 2
      %s34 = scalar_select %p33, 0, %s32
      %s36 = sadd.s32 %s35, 1
      %p39 = scmp.eq.s32.totalorder %s15, 1
      %p40 = scmp.ne.s32.totalorder %s35, %s37
      %p41 = scmp.eq.s32.totalorder %s15, 0
      %p42 = por %p40, %p41
      %p43 = scmp.ne.s32.totalorder %s35, %s37
      %p44 = scmp.eq.s32.totalorder %s20, 1
      %p45 = por %p43, %p44
      %p46 = scmp.ne.s32.totalorder %s37, %s38
      %p47 = scmp.eq.s32.totalorder %s20, 0
      %p48 = por %p46, %p47
      %p49 = scmp.ne.s32.totalorder %s37, %s38
      %p50 = scmp.eq.s32.totalorder %s21, 1
      %p51 = por %p49, %p50
      %p53 = scmp.ne.s32.totalorder %s38, %s52
      %p54 = scmp.eq.s32.totalorder %s21, 0
      %p55 = por %p53, %p54
      %s56 = ssub.s32 %s22, %s34
      %s57 = ssub.s32 %s23, %s30
      %s58 = sor.u32 %s56, %s57
      %p59 = scmp.eq.s32.totalorder %s58, 0
      %s61 = sadd.s32 %s60, 1
      %s62 = scalar_select %p59, %s60, %s61
      %p65 = pneg %p59
      %p66 = scmp.eq.s32.totalorder %s15, 1
      %p67 = por %p65, %p66
      %p68 = scmp.ne.s32.totalorder %s60, %s63
      %p69 = scmp.eq.s32.totalorder %s15, 0
      %p70 = por %p68, %p69
      %p71 = scmp.ne.s32.totalorder %s60, %s63
      %p72 = scmp.eq.s32.totalorder %s20, 1
      %p73 = por %p71, %p72
      %p74 = scmp.ne.s32.totalorder %s63, %s64
      %p75 = scmp.eq.s32.totalorder %s20, 0
      %p76 = por %p74, %p75
      %p77 = scmp.ne.s32.totalorder %s63, %s64
      %p78 = scmp.eq.s32.totalorder %s21, 1
      %p79 = por %p77, %p78
      %p81 = scmp.ne.s32.totalorder %s64, %s80
      %p82 = scmp.eq.s32.totalorder %s21, 0
      %p83 = por %p81, %p82
      %s84 = ssub.s32 %s22, %s34
      %s85 = ssub.s32 %s23, %s30
      %s86 = sor.u32 %s84, %s85
      %p87 = scmp.eq.s32.totalorder %s86, 0
      %s89 = sadd.s32 %s88, 1
      %s90 = scalar_select %p87, %s88, %s89
      %p93 = pneg %p87
      %p94 = scmp.eq.s32.totalorder %s15, 1
      %p95 = por %p93, %p94
      %p96 = scmp.ne.s32.totalorder %s88, %s91
      %p97 = scmp.eq.s32.totalorder %s15, 0
      %p98 = por %p96, %p97
      %p99 = scmp.ne.s32.totalorder %s88, %s91
      %p100 = scmp.eq.s32.totalorder %s20, 1
      %p101 = por %p99, %p100
      %p102 = scmp.ne.s32.totalorder %s91, %s92
      %p103 = scmp.eq.s32.totalorder %s20, 0
      %p104 = por %p102, %p103
      %p105 = scmp.ne.s32.totalorder %s91, %s92
      %p106 = scmp.eq.s32.totalorder %s21, 1
      %p107 = por %p105, %p106
      %p109 = scmp.ne.s32.totalorder %s92, %s108
      %p110 = scmp.eq.s32.totalorder %s21, 0
      %p111 = por %p109, %p110
      %p112 = scmp.le.s32.totalorder 1, %s15
      %p113 = scmp.lt.s32.totalorder %s15, 3
      %p114 = pnand %p112, %p113
      %p115 = pneg %p114
      // Predicated region
      $region9: #{tpu_custom_call.1} parent=5 // pred_check
        _
      $region10: #{tpu_custom_call.1} parent=5 // pred_check_branch
        %117 = sbr.rel (%p114) target = $region12
      $region11: #{tpu_custom_call.1} parent=5 // pred_region
        %s118 = ssub.s32 %s15, 1
        // Predicated region
        $region13: #{tpu_custom_call.1} parent=11 // pred_check
          %p119 = pneg %p48
        $region14: #{tpu_custom_call.1} parent=11 // pred_check_branch
          %121 = sbr.rel (%p119) target = $region16
        $region15: #{tpu_custom_call.1} parent=11 // pred_region
          %123 = vsyncadd [#allocation3], 0
          %s125 = sshll.u32 %s0, 4
          %s126 = int_to_ptr.hbm [resolvable:$true] %s125
          %s127 = sshll.u32 [#allocation2], 4
          %s128 = int_to_ptr.vmem [resolvable:$true] %s127
          %130 = dma.hbm_to_vmem [thread:$0]  %s126, 128, %s128, [#allocation3]
        $region16: #{tpu_custom_call.1} parent=11 // pred_fallthru
          _
      $region12: #{tpu_custom_call.1} parent=5 // pred_fallthru
        _
      %p131 = scmp.lt.s32.totalorder %s15, 2
      // Predicated region
      $region17: #{tpu_custom_call.1} parent=5 // pred_check
        %p132 = pneg %p131
      $region18: #{tpu_custom_call.1} parent=5 // pred_check_branch
        %134 = sbr.rel (%p132) target = $region20
      $region19: #{tpu_custom_call.1} parent=5 // pred_region
        // Predicated region
        $region21: #{tpu_custom_call.1} parent=19 // pred_check
          %p135 = pneg %p70
        $region22: #{tpu_custom_call.1} parent=19 // pred_check_branch
          %137 = sbr.rel (%p135) target = $region24
        $region23: #{tpu_custom_call.1} parent=19 // pred_region
          %s138 = sand.u32 %s60, 1
          %s139 = scalar_lea.sflag [#allocation6], %s138
          %s140 = sand.u32 %s60, 1
          %s141 = smul.addr %s140, 16
          %s142 = scalar_lea.vmem [#allocation5], %s141
          %s143 = smul.u32 2, %s23
          %145 = vsyncadd %s139, 0
          %s146 = smul.addr %s22, 2
          %s147 = sadd.s32 %s143, %s146
          %s148 = smul.addr %s147, 8
          %s149 = scalar_lea.hbm %s1, %s148
          %s151 = sshll.u32 %s149, 4
          %s152 = int_to_ptr.hbm [resolvable:$true] %s151
          %s153 = sshll.u32 %s142, 4
          %s154 = int_to_ptr.vmem [resolvable:$true] %s153
          %156 = dma.hbm_to_vmem [thread:$0]  %s152, 256, %s154, %s139
        $region24: #{tpu_custom_call.1} parent=19 // pred_fallthru
          _
      $region20: #{tpu_custom_call.1} parent=5 // pred_fallthru
        _
      %p157 = scmp.le.s32.totalorder 1, %s15
      %p158 = scmp.lt.s32.totalorder %s15, 3
      %p159 = pnand %p157, %p158
      %p160 = pneg %p159
      // Predicated region
      $region25: #{tpu_custom_call.1} parent=5 // pred_check
        _
      $region26: #{tpu_custom_call.1} parent=5 // pred_check_branch
        %162 = sbr.rel (%p159) target = $region28
      $region27: #{tpu_custom_call.1} parent=5 // pred_region
        %s163 = ssub.s32 %s15, 1
        // Predicated region
        $region29: #{tpu_custom_call.1} parent=27 // pred_check
          %p164 = pneg %p48
        $region30: #{tpu_custom_call.1} parent=27 // pred_check_branch
          %166 = sbr.rel (%p164) target = $region32
        $region31: #{tpu_custom_call.1} parent=27 // pred_region
          %168 = dma.done [#allocation3], 128
        $region32: #{tpu_custom_call.1} parent=27 // pred_fallthru
          _
        %s169 = sand.u32 %s63, 1
        %s170 = scalar_lea.sflag [#allocation6], %s169
        %s171 = sand.u32 %s63, 1
        %s172 = smul.addr %s171, 16
        %s173 = scalar_lea.vmem [#allocation5], %s172
        // Predicated region
        $region33: #{tpu_custom_call.1} parent=27 // pred_check
          %p174 = pneg %p76
        $region34: #{tpu_custom_call.1} parent=27 // pred_check_branch
          %176 = sbr.rel (%p174) target = $region36
        $region35: #{tpu_custom_call.1} parent=27 // pred_region
          %178 = dma.done %s170, 256
        $region36: #{tpu_custom_call.1} parent=27 // pred_fallthru
          _
        %p179 = pneg %p48
        %p180 = pneg %p45
        %s181 = sand.u32 %s63, 1
        %s182 = scalar_lea.sflag [#allocation6], %s181
        %s183 = sand.u32 %s63, 1
        %s184 = smul.addr %s183, 16
        %s185 = scalar_lea.vmem [#allocation5], %s184
        %p186 = pneg %p76
        %p187 = pneg %p73
        %p188 = pneg %p104
        %p189 = pneg %p101
        %s190 = sand.u32 %s91, 1
        %s191 = scalar_lea.sflag [#allocation4], %s190
        %s192 = sand.u32 %s91, 1
        %s193 = smul.addr %s192, 16
        %s194 = scalar_lea.vmem [#allocation7], %s193
        %s195 = smul.u32 2, %s25
        %s196 = smul.u32 2, %s25
        %v197 = vld [vmem:[%s173] sm:$0xff]
        %v198 = vld [vmem:[%s173 + $0x8] sm:$0xff]
        %v199 = vmul.f32 %v197, %v197
        %v200 = vmul.f32 %v198, %v198
        %v201 = vld [vmem:[#allocation2] sm:$0xff]
        %vm202 = vcmask 64512
        %v204 = vsel %vm202, %v201, 0
        %206 = vmatpush.msra.mxu0 0.0
        %207 = vmatpush.msra.mxu0 0.0
        %208 = vmatpush.msra.mxu0 0.0
        %209 = vmatpush.msra.mxu0 0.0
        %210 = vmatpush.msra.mxu0 0.0
        %211 = vmatpush.msra.mxu0 0.0
        %212 = vmatpush.msra.mxu0 0.0
        %213 = vmatpush.msra.mxu0 0.0
        %214 = vmatpush.msra.mxu0 0.0
        %215 = vmatpush.msra.mxu0 0.0
        %216 = vmatpush.msra.mxu0 0.0
        %217 = vmatpush.msra.mxu0 0.0
        %218 = vmatpush.msra.mxu0 0.0
        %219 = vmatpush.msra.mxu0 0.0
        %220 = vmatpush.msra.mxu0 0.0
        %221 = vmatpush.msra.mxu0 %v199
        %222 = vmatmul.f32.gmra.mxu0 %v204
        %v223 = vpop.f32.mrf.mxu0
        %v224 = vadd.f32 1.0, %v223
        %225 = vdwg.mxu0
        %226 = vmatpush.msra.mxu0 0.0
        %227 = vmatpush.msra.mxu0 0.0
        %228 = vmatpush.msra.mxu0 0.0
        %229 = vmatpush.msra.mxu0 0.0
        %230 = vmatpush.msra.mxu0 0.0
        %231 = vmatpush.msra.mxu0 0.0
        %232 = vmatpush.msra.mxu0 0.0
        %233 = vmatpush.msra.mxu0 0.0
        %234 = vmatpush.msra.mxu0 0.0
        %235 = vmatpush.msra.mxu0 0.0
        %236 = vmatpush.msra.mxu0 0.0
        %237 = vmatpush.msra.mxu0 0.0
        %238 = vmatpush.msra.mxu0 0.0
        %239 = vmatpush.msra.mxu0 0.0
        %240 = vmatpush.msra.mxu0 0.0
        %241 = vmatpush.msra.mxu0 %v200
        %242 = vmatmul.f32.gmra.mxu0 %v204
        %v243 = vpop.f32.mrf.mxu0
        %v244 = vadd.f32 1.0, %v243
        %245 = vdwg.mxu0
        %v246 = vrsqrt.pop %v224
        %v247 = vmul.f32 %v246, %v224
        %v248 = vmul.f32 %v247, %v246
        %v249 = vmul.f32 0.5, %v248
        %v250 = vsub.f32 1.5, %v249
        %v251 = vmul.f32 %v246, %v250
        %vm252 = vweird.f32 %v224
        %vm253 = vweird.f32 %v246
        %vm254 = vmor %vm252, %vm253
        %v255 = vsel %vm254, %v246, %v251
        %v256 = vrsqrt.pop %v244
        %v257 = vmul.f32 %v256, %v244
        %v258 = vmul.f32 %v257, %v256
        %v259 = vmul.f32 0.5, %v258
        %v260 = vsub.f32 1.5, %v259
        %v261 = vmul.f32 %v256, %v260
        %vm262 = vweird.f32 %v244
        %vm263 = vweird.f32 %v256
        %vm264 = vmor %vm262, %vm263
        %v265 = vsel %vm264, %v256, %v261
        %v266 = vrsqrt.pop %v255
        %v267 = vmul.f32 %v266, %v255
        %v268 = vmul.f32 %v267, %v266
        %v269 = vmul.f32 0.5, %v268
        %v270 = vsub.f32 1.5, %v269
        %v271 = vmul.f32 %v266, %v270
        %v272 = vmul.f32 %v255, %v271
        %vm273 = vcmp.eq.f32.partialorder %v255, inf
        %v274 = vsel %vm273, %v255, %v272
        %vm275 = vcmp.eq.f32.partialorder %v255, 0.0
        %v276 = vand.u32 %v255, 2147483648
        %v277 = vsel %vm275, %v276, %v274
        %v278 = vrsqrt.pop %v265
        %v279 = vmul.f32 %v278, %v265
        %v280 = vmul.f32 %v279, %v278
        %v281 = vmul.f32 0.5, %v280
        %v282 = vsub.f32 1.5, %v281
        %v283 = vmul.f32 %v278, %v282
        %v284 = vmul.f32 %v265, %v283
        %vm285 = vcmp.eq.f32.partialorder %v265, inf
        %v286 = vsel %vm285, %v265, %v284
        %vm287 = vcmp.eq.f32.partialorder %v265, 0.0
        %v288 = vand.u32 %v265, 2147483648
        %v289 = vsel %vm287, %v288, %v286
        %v290 = vmul.f32 %v255, %v277
        %v291 = vmul.f32 %v265, %v289
        %v292 = vmul.f32 %v197, %v290
        %v293 = vmul.f32 %v198, %v291
        %294 = vst [vmem:[%s194] sm:$0xff] %v292
        %295 = vst [vmem:[%s194 + $0x8] sm:$0xff] %v293
        %s296 = sand.u32 %s91, 1
        %s297 = scalar_lea.sflag [#allocation4], %s296
        %s298 = sand.u32 %s91, 1
        %s299 = smul.addr %s298, 16
        %s300 = scalar_lea.vmem [#allocation7], %s299
        // Predicated region
        $region37: #{tpu_custom_call.1} parent=27 // pred_check
          %p301 = pneg %p101
        $region38: #{tpu_custom_call.1} parent=27 // pred_check_branch
          %303 = sbr.rel (%p301) target = $region40
        $region39: #{tpu_custom_call.1} parent=27 // pred_region
          %s304 = smul.u32 2, %s25
          %306 = vsyncadd %s297, 0
          %s307 = smul.addr %s24, 2
          %s308 = sadd.s32 %s304, %s307
          %s309 = smul.addr %s308, 8
          %s310 = scalar_lea.hbm %s2, %s309
          %s312 = sshll.u32 %s300, 4
          %s313 = int_to_ptr.vmem [resolvable:$true] %s312
          %s314 = sshll.u32 %s310, 4
          %s315 = int_to_ptr.hbm [resolvable:$true] %s314
          %317 = dma.vmem_to_hbm [thread:$0]  %s313, 256, %s315, %s297
        $region40: #{tpu_custom_call.1} parent=27 // pred_fallthru
          _
      $region28: #{tpu_custom_call.1} parent=5 // pred_fallthru
        _
      %p318 = scmp.le.s32.totalorder 2, %s15
      // Predicated region
      $region41: #{tpu_custom_call.1} parent=5 // pred_check
        %p319 = pneg %p318
      $region42: #{tpu_custom_call.1} parent=5 // pred_check_branch
        %321 = sbr.rel (%p319) target = $region44
      $region43: #{tpu_custom_call.1} parent=5 // pred_region
        %s322 = ssub.s32 %s15, 2
        // Predicated region
        $region45: #{tpu_custom_call.1} parent=43 // pred_check
          %p323 = pneg %p107
        $region46: #{tpu_custom_call.1} parent=43 // pred_check_branch
          %325 = sbr.rel (%p323) target = $region48
        $region47: #{tpu_custom_call.1} parent=43 // pred_region
          %s326 = sand.u32 %s92, 1
          %s327 = scalar_lea.sflag [#allocation4], %s326
          %s328 = sand.u32 %s92, 1
          %s329 = smul.addr %s328, 16
          %s330 = scalar_lea.vmem [#allocation7], %s329
          %332 = dma.done %s327, 256
        $region48: #{tpu_custom_call.1} parent=43 // pred_fallthru
          _
      $region44: #{tpu_custom_call.1} parent=5 // pred_fallthru
        _
    $region6: #{tpu_custom_call.1} parent=1 // loop_footer
      %s19 = sadd.s32 1, %s15
    $region7: #{tpu_custom_call.1} parent=1 // loop_footer_branch
      %14 = sbr.rel target = $region3
    $region8: #{tpu_custom_call.1} parent=1 // loop_exit
      _
    %333 = vsyncpa [#allocation3], 1
    %s334 = scalar_lea.sflag [#allocation3], 1
    %335 = vsyncpa %s334, 1
    %336 = vsyncpa [#allocation6], 1
    %s337 = scalar_lea.sflag [#allocation6], 1
    %338 = vsyncpa %s337, 1
    %339 = vsyncpa [#allocation4], 1
    %s340 = scalar_lea.sflag [#allocation4], 1
    %341 = vsyncpa %s340, 1

</llo_original>
